<compile_context>
chip_gen: v5e
topology: v5e:2x2
jax: 0.10.0
libtpu: 0.0.40
codegen_flags: <defaults>
</compile_context>

<pallas_src>
import functools

import jax
import jax.numpy as jnp
from jax.experimental import pallas as pl
from jax.experimental.pallas import tpu as pltpu


def _round_up(x, m):
    return (x + m - 1) // m * m


# ----------------------------------------------------------------------------
# Kernel
# ----------------------------------------------------------------------------
def ae_kernel(x_ref, w0_ref, w1_ref, w2_ref, w3_ref, w4_ref, w5_ref, b_ref,
              enc_ref, dec_ref, *, out_cols, relu_flags, compute_dtype):
    """One batch tile of the 6-layer MLP autoencoder.

    Each layer's weight is an independent, per-layer-padded (in_pad, out_pad)
    block resident in VMEM (constant index_map), so every matmul is only as
    wide as that layer needs.  Matmul operands are `compute_dtype` (bf16 by
    default), accumulation / bias / ReLU are f32.  The encoder activation is
    stored to enc_ref as soon as layer 2 finishes so it is not held live
    through the decoder; zero-padded weight columns / bias lanes guarantee the
    padded activation lanes stay exactly zero through every layer.
    """
    w_refs = (w0_ref, w1_ref, w2_ref, w3_ref, w4_ref, w5_ref)
    h = x_ref[...]                                        # (TB, h_in), compute dtype
    for li in range(6):
        y = jnp.dot(h, w_refs[li][...],
                    preferred_element_type=jnp.float32)   # (TB, out_cols[li]) f32
        y = y + b_ref[li:li + 1, :out_cols[li]]           # f32 bias add (static slice)
        if relu_flags[li]:
            y = jnp.maximum(y, 0.0)
        if li == 2:
            enc_ref[...] = y.astype(enc_ref.dtype)        # write encoder output now
        if li == 5:
            dec_ref[...] = y.astype(dec_ref.dtype)
        else:
            h = y.astype(compute_dtype)                   # operand for next layer


# ----------------------------------------------------------------------------
# One-time parameter packing (done at init, not per forward call)
# ----------------------------------------------------------------------------
def pack_params(params, compute_dtype=jnp.bfloat16):
    """params: 6 (W, b) pairs in PyTorch layout W=(out, in), b=(out,).

    Per-layer lane padding: every layer's output (lane) dim is padded to its
    OWN multiple of 128; its input (row) dim matches the previous layer's
    padded output (the first layer keeps the raw h_in rows so x needs no
    wrapper-side padding).  Returns (w_list, b_slab, cfg):
      w_list : 6 zero-padded, transposed weights, dtype = compute_dtype
      b_slab : (8, p_max) f32, row i = zero-padded bias of layer i
    """
    dims_out = [int(w.shape[0]) for (w, _) in params]
    dims_in = [int(w.shape[1]) for (w, _) in params]
    h_in, h1, h2 = dims_in[0], dims_in[1], dims_in[2]
    h3 = dims_out[2]
    assert dims_in == [h_in, h1, h2, h3, h2, h1], "unexpected AE layer dims"
    assert dims_out == [h1, h2, h3, h2, h1, h_in], "unexpected AE layer dims"

    out_cols = [_round_up(d, 128) for d in dims_out]       # per-layer lane widths
    in_rows = [h_in] + out_cols[:5]                        # rows feeding each layer
    p_max = max(out_cols)

    w_list, b_rows = [], []
    for li, (w, b) in enumerate(params):
        wt = jnp.asarray(w, jnp.float32).T                 # (in, out)
        wi = jnp.zeros((in_rows[li], out_cols[li]), jnp.float32)
        wi = wi.at[:dims_in[li], :dims_out[li]].set(wt)
        w_list.append(wi.astype(compute_dtype))
        bi = jnp.zeros((p_max,), jnp.float32)
        bi = bi.at[:dims_out[li]].set(jnp.asarray(b, jnp.float32))
        b_rows.append(bi)
    b_slab = jnp.stack(b_rows + [jnp.zeros((p_max,), jnp.float32)] * 2, axis=0)

    cfg = dict(h_in=h_in, h3=h3, out_cols=tuple(out_cols), p_max=p_max,
               compute_dtype=compute_dtype)
    return w_list, b_slab, cfg


# ----------------------------------------------------------------------------
# Forward wrapper
# ----------------------------------------------------------------------------
def ae_forward(x, w_list, b_slab, cfg, *, block_rows=1024):
    """x: (B, h_in) -> (encoded (B, h3), decoded (B, h_in)), both float32."""
    B, h_in = x.shape
    assert h_in == cfg["h_in"]
    h3 = cfg["h3"]
    out_cols = cfg["out_cols"]
    compute_dtype = cfg["compute_dtype"]
    p_enc, p_dec = out_cols[2], out_cols[5]

    # Batch tile: multiple of 8, capped by block_rows, and (when B allows it)
    # at least 2 grid steps so the "parallel" batch axis can shard across both
    # v7x TensorCores.  Per-step overhead is ~0.35us so keep tiles large.
    assert block_rows % 8 == 0
    TB = min(block_rows, _round_up(B, 8))
    if B > 8:
        TB = min(TB, _round_up((B + 1) // 2, 8))
    TB = max(TB, 8)
    B_pad = _round_up(B, TB)

    x_p = x.astype(compute_dtype)
    if B_pad != B:
        x_p = jnp.pad(x_p, ((0, B_pad - B), (0, 0)))

    kernel = functools.partial(
        ae_kernel,
        out_cols=out_cols,
        relu_flags=(True, True, False, True, True, False),
        compute_dtype=compute_dtype,
    )

    # VMEM budget computed from actual buffer sizes: double-buffered x/enc/dec
    # streams, resident weights/bias (conservatively counted twice), plus a few
    # live (TB, p_max) f32 temporaries; floor gives compiler scratch headroom.
    isz = jnp.dtype(compute_dtype).itemsize
    w_bytes = sum(int(w.size) * w.dtype.itemsize for w in w_list)
    b_bytes = int(b_slab.size) * 4
    stream_bytes = TB * h_in * isz + TB * (p_enc + p_dec) * 4
    temp_bytes = 4 * TB * cfg["p_max"] * 4
    vmem_limit = int(min(100 * 2 ** 20,
                         max(8 * 2 ** 20,
                             2 * (stream_bytes + w_bytes + b_bytes) + temp_bytes)))

    def const_spec(shape):
        return pl.BlockSpec(shape, lambda i: (0, 0))

    enc_p, dec_p = pl.pallas_call(
        kernel,
        out_shape=(jax.ShapeDtypeStruct((B_pad, p_enc), jnp.float32),
                   jax.ShapeDtypeStruct((B_pad, p_dec), jnp.float32)),
        grid=(B_pad // TB,),
        in_specs=[pl.BlockSpec((TB, h_in), lambda i: (i, 0))]      # batch-tiled x
                 + [const_spec(w.shape) for w in w_list]           # resident weights
                 + [const_spec(b_slab.shape)],                     # resident biases
        out_specs=(pl.BlockSpec((TB, p_enc), lambda i: (i, 0)),    # enc, 128-aligned
                   pl.BlockSpec((TB, p_dec), lambda i: (i, 0))),   # dec, 128-aligned
        compiler_params=pltpu.CompilerParams(
            dimension_semantics=("parallel",),                     # megacore on v7x
            vmem_limit_bytes=vmem_limit,
        ),
    )(x_p, *w_list, b_slab)

    return enc_p[:B, :h3], dec_p[:B, :h_in]


# ----------------------------------------------------------------------------
# Reference + init (PyTorch-equivalent semantics)
# ----------------------------------------------------------------------------
def init_linear(key, out_features, in_features):
    kw, kb = jax.random.split(key)
    bound = 1.0 / jnp.sqrt(in_features)
    w = jax.random.uniform(kw, (out_features, in_features), jnp.float32, -bound, bound)
    b = jax.random.uniform(kb, (out_features,), jnp.float32, -bound, bound)
    return w, b


def ref_forward(x, params):
    def lin(h, w, b):
        return h @ w.T + b
    h = jax.nn.relu(lin(x, *params[0]))
    h = jax.nn.relu(lin(h, *params[1]))
    enc = lin(h, *params[2])
    d = jax.nn.relu(lin(enc, *params[3]))
    d = jax.nn.relu(lin(d, *params[4]))
    dec = lin(d, *params[5])
    return enc, dec


if __name__ == "__main__":
    B, h_in, h1, h2, h3 = 8, 64, 32, 16, 8

    key = jax.random.PRNGKey(0)
    keys = jax.random.split(key, 8)
    x = jax.random.normal(keys[0], (B, h_in), jnp.float32)

    layer_dims = [(h1, h_in), (h2, h1), (h3, h2),   # encoder
                  (h2, h3), (h1, h2), (h_in, h1)]   # decoder
    params = [init_linear(k, o, i) for k, (o, i) in zip(keys[1:7], layer_dims)]

    enc_ref, dec_ref = ref_forward(x, params)

    # --- f32 operand path (exact semantics check) ---
    w32, b32, cfg32 = pack_params(params, compute_dtype=jnp.float32)
    enc, dec = jax.block_until_ready(ae_forward(x, w32, b32, cfg32))
    assert enc.shape == (B, h3) and dec.shape == (B, h_in)
    assert jnp.allclose(enc, enc_ref, atol=1e-4, rtol=1e-4)
    assert jnp.allclose(dec, dec_ref, atol=1e-4, rtol=1e-4)

    # --- default bf16 matmul-operand path (f32 accumulation / bias / ReLU) ---
    wbf, bbf, cfgbf = pack_params(params)   # compute_dtype defaults to bf16
    enc_b, dec_b = jax.block_until_ready(ae_forward(x, wbf, bbf, cfgbf))
    assert jnp.allclose(enc_b, enc_ref, atol=5e-2, rtol=5e-2)
    assert jnp.allclose(dec_b, dec_ref, atol=5e-2, rtol=5e-2)

    # --- multi-tile grid + non-divisible-batch padding path ---
    x_big = jax.random.normal(keys[7], (40, h_in), jnp.float32)
    enc_g, dec_g = jax.block_until_ready(
        ae_forward(x_big, w32, b32, cfg32, block_rows=16))   # 3 grid steps
    enc_gr, dec_gr = ref_forward(x_big, params)
    assert jnp.allclose(enc_g, enc_gr, atol=1e-4, rtol=1e-4)
    assert jnp.allclose(dec_g, dec_gr, atol=1e-4, rtol=1e-4)

    print("KERNEL_OK")
</pallas_src>

<mosaic_0001>
module attributes {stable_mosaic.version = 11 : i64} {
  func.func @ae_kernel(%arg0: i32, %arg1: memref<8x64xf32, #tpu.memory_space<vmem>>, %arg2: memref<64x128xf32, #tpu.memory_space<vmem>>, %arg3: memref<128x128xf32, #tpu.memory_space<vmem>>, %arg4: memref<128x128xf32, #tpu.memory_space<vmem>>, %arg5: memref<128x128xf32, #tpu.memory_space<vmem>>, %arg6: memref<128x128xf32, #tpu.memory_space<vmem>>, %arg7: memref<128x128xf32, #tpu.memory_space<vmem>>, %arg8: memref<8x128xf32, #tpu.memory_space<vmem>>, %arg9: memref<8x128xf32, #tpu.memory_space<vmem>>, %arg10: memref<8x128xf32, #tpu.memory_space<vmem>>) attributes {dimension_semantics = [#tpu.dimension_semantics<parallel>], iteration_bounds = array<i64: 1>, scalar_prefetch = 0 : i64, scratch_operands = 0 : i64, tpu.core_type = #tpu.core_type<tc>, window_params = [{transform_indices = @transform_0, window_bounds = array<i64: 8, 64>}, {pipeline_mode = #tpu.pipeline_mode<synchronous>, transform_indices = @transform_1, window_bounds = array<i64: 64, 128>}, {pipeline_mode = #tpu.pipeline_mode<synchronous>, transform_indices = @transform_2, window_bounds = array<i64: 128, 128>}, {pipeline_mode = #tpu.pipeline_mode<synchronous>, transform_indices = @transform_3, window_bounds = array<i64: 128, 128>}, {pipeline_mode = #tpu.pipeline_mode<synchronous>, transform_indices = @transform_4, window_bounds = array<i64: 128, 128>}, {pipeline_mode = #tpu.pipeline_mode<synchronous>, transform_indices = @transform_5, window_bounds = array<i64: 128, 128>}, {pipeline_mode = #tpu.pipeline_mode<synchronous>, transform_indices = @transform_6, window_bounds = array<i64: 128, 128>}, {pipeline_mode = #tpu.pipeline_mode<synchronous>, transform_indices = @transform_7, window_bounds = array<i64: 8, 128>}, {transform_indices = @transform_8, window_bounds = array<i64: 8, 128>}, {transform_indices = @transform_9, window_bounds = array<i64: 8, 128>}]} {
    %c0 = arith.constant 0 : index
    %c0_0 = arith.constant 0 : index
    %0 = vector.load %arg1[%c0, %c0_0] : memref<8x64xf32, #tpu.memory_space<vmem>>, vector<8x64xf32>
    %c0_1 = arith.constant 0 : index
    %c0_2 = arith.constant 0 : index
    %1 = vector.load %arg2[%c0_1, %c0_2] : memref<64x128xf32, #tpu.memory_space<vmem>>, vector<64x128xf32>
    %cst = arith.constant dense<0.000000e+00> : vector<8x128xf32>
    %2 = tpu.matmul %0, %1, %cst {dimension_numbers = #tpu.dot_dimension_numbers<[1], [0], [0], [1], [0, 0, 1, 1], [], []>} : vector<8x64xf32>, vector<64x128xf32>, vector<8x128xf32> -> vector<8x128xf32>
    %c0_3 = arith.constant 0 : index
    %c0_4 = arith.constant 0 : index
    %3 = vector.load %arg8[%c0_3, %c0_4] : memref<8x128xf32, #tpu.memory_space<vmem>>, vector<1x128xf32>
    %4 = vector.broadcast %3 : vector<1x128xf32> to vector<8x128xf32>
    %5 = arith.addf %2, %4 : vector<8x128xf32>
    %cst_5 = arith.constant 0.000000e+00 : f32
    %6 = vector.broadcast %cst_5 : f32 to vector<8x128xf32>
    %7 = arith.maximumf %5, %6 : vector<8x128xf32>
    %c0_6 = arith.constant 0 : index
    %c0_7 = arith.constant 0 : index
    %8 = vector.load %arg3[%c0_6, %c0_7] : memref<128x128xf32, #tpu.memory_space<vmem>>, vector<128x128xf32>
    %cst_8 = arith.constant dense<0.000000e+00> : vector<8x128xf32>
    %9 = tpu.matmul %7, %8, %cst_8 {dimension_numbers = #tpu.dot_dimension_numbers<[1], [0], [0], [1], [0, 0, 1, 1], [], []>} : vector<8x128xf32>, vector<128x128xf32>, vector<8x128xf32> -> vector<8x128xf32>
    %c1 = arith.constant 1 : index
    %c0_9 = arith.constant 0 : index
    %10 = vector.load %arg8[%c1, %c0_9] : memref<8x128xf32, #tpu.memory_space<vmem>>, vector<1x128xf32>
    %11 = vector.broadcast %10 : vector<1x128xf32> to vector<8x128xf32>
    %12 = arith.addf %9, %11 : vector<8x128xf32>
    %cst_10 = arith.constant 0.000000e+00 : f32
    %13 = vector.broadcast %cst_10 : f32 to vector<8x128xf32>
    %14 = arith.maximumf %12, %13 : vector<8x128xf32>
    %c0_11 = arith.constant 0 : index
    %c0_12 = arith.constant 0 : index
    %15 = vector.load %arg4[%c0_11, %c0_12] : memref<128x128xf32, #tpu.memory_space<vmem>>, vector<128x128xf32>
    %cst_13 = arith.constant dense<0.000000e+00> : vector<8x128xf32>
    %16 = tpu.matmul %14, %15, %cst_13 {dimension_numbers = #tpu.dot_dimension_numbers<[1], [0], [0], [1], [0, 0, 1, 1], [], []>} : vector<8x128xf32>, vector<128x128xf32>, vector<8x128xf32> -> vector<8x128xf32>
    %c2 = arith.constant 2 : index
    %c0_14 = arith.constant 0 : index
    %17 = vector.load %arg8[%c2, %c0_14] : memref<8x128xf32, #tpu.memory_space<vmem>>, vector<1x128xf32>
    %18 = vector.broadcast %17 : vector<1x128xf32> to vector<8x128xf32>
    %19 = arith.addf %16, %18 : vector<8x128xf32>
    %c0_15 = arith.constant 0 : index
    %c0_16 = arith.constant 0 : index
    %20 = vector.load %arg9[%c0_15, %c0_16] : memref<8x128xf32, #tpu.memory_space<vmem>>, vector<8x128xf32>
    tpu.vector_store %arg9[%c0_15, %c0_16], %19 {strides = array<i32>} : memref<8x128xf32, #tpu.memory_space<vmem>>, vector<8x128xf32>,
    %c0_17 = arith.constant 0 : index
    %c0_18 = arith.constant 0 : index
    %21 = vector.load %arg5[%c0_17, %c0_18] : memref<128x128xf32, #tpu.memory_space<vmem>>, vector<128x128xf32>
    %cst_19 = arith.constant dense<0.000000e+00> : vector<8x128xf32>
    %22 = tpu.matmul %19, %21, %cst_19 {dimension_numbers = #tpu.dot_dimension_numbers<[1], [0], [0], [1], [0, 0, 1, 1], [], []>} : vector<8x128xf32>, vector<128x128xf32>, vector<8x128xf32> -> vector<8x128xf32>
    %c3 = arith.constant 3 : index
    %c0_20 = arith.constant 0 : index
    %23 = vector.load %arg8[%c3, %c0_20] : memref<8x128xf32, #tpu.memory_space<vmem>>, vector<1x128xf32>
    %24 = vector.broadcast %23 : vector<1x128xf32> to vector<8x128xf32>
    %25 = arith.addf %22, %24 : vector<8x128xf32>
    %cst_21 = arith.constant 0.000000e+00 : f32
    %26 = vector.broadcast %cst_21 : f32 to vector<8x128xf32>
    %27 = arith.maximumf %25, %26 : vector<8x128xf32>
    %c0_22 = arith.constant 0 : index
    %c0_23 = arith.constant 0 : index
    %28 = vector.load %arg6[%c0_22, %c0_23] : memref<128x128xf32, #tpu.memory_space<vmem>>, vector<128x128xf32>
    %cst_24 = arith.constant dense<0.000000e+00> : vector<8x128xf32>
    %29 = tpu.matmul %27, %28, %cst_24 {dimension_numbers = #tpu.dot_dimension_numbers<[1], [0], [0], [1], [0, 0, 1, 1], [], []>} : vector<8x128xf32>, vector<128x128xf32>, vector<8x128xf32> -> vector<8x128xf32>
    %c4 = arith.constant 4 : index
    %c0_25 = arith.constant 0 : index
    %30 = vector.load %arg8[%c4, %c0_25] : memref<8x128xf32, #tpu.memory_space<vmem>>, vector<1x128xf32>
    %31 = vector.broadcast %30 : vector<1x128xf32> to vector<8x128xf32>
    %32 = arith.addf %29, %31 : vector<8x128xf32>
    %cst_26 = arith.constant 0.000000e+00 : f32
    %33 = vector.broadcast %cst_26 : f32 to vector<8x128xf32>
    %34 = arith.maximumf %32, %33 : vector<8x128xf32>
    %c0_27 = arith.constant 0 : index
    %c0_28 = arith.constant 0 : index
    %35 = vector.load %arg7[%c0_27, %c0_28] : memref<128x128xf32, #tpu.memory_space<vmem>>, vector<128x128xf32>
    %cst_29 = arith.constant dense<0.000000e+00> : vector<8x128xf32>
    %36 = tpu.matmul %34, %35, %cst_29 {dimension_numbers = #tpu.dot_dimension_numbers<[1], [0], [0], [1], [0, 0, 1, 1], [], []>} : vector<8x128xf32>, vector<128x128xf32>, vector<8x128xf32> -> vector<8x128xf32>
    %c5 = arith.constant 5 : index
    %c0_30 = arith.constant 0 : index
    %37 = vector.load %arg8[%c5, %c0_30] : memref<8x128xf32, #tpu.memory_space<vmem>>, vector<1x128xf32>
    %38 = vector.broadcast %37 : vector<1x128xf32> to vector<8x128xf32>
    %39 = arith.addf %36, %38 : vector<8x128xf32>
    %c0_31 = arith.constant 0 : index
    %c0_32 = arith.constant 0 : index
    %40 = vector.load %arg10[%c0_31, %c0_32] : memref<8x128xf32, #tpu.memory_space<vmem>>, vector<8x128xf32>
    tpu.vector_store %arg10[%c0_31, %c0_32], %39 {strides = array<i32>} : memref<8x128xf32, #tpu.memory_space<vmem>>, vector<8x128xf32>,
    return
  }
  func.func @transform_0(%arg0: i32) -> (i32, i32) {
    %c0_i32 = arith.constant 0 : i32
    %c0_i32_0 = arith.constant 0 : i32
    return %arg0, %c0_i32 : i32, i32
  }
  func.func @transform_1(%arg0: i32) -> (i32, i32) {
    %c0_i32 = arith.constant 0 : i32
    %c0_i32_0 = arith.constant 0 : i32
    %c0_i32_1 = arith.constant 0 : i32
    return %c0_i32, %c0_i32_0 : i32, i32
  }
  func.func @transform_2(%arg0: i32) -> (i32, i32) {
    %c0_i32 = arith.constant 0 : i32
    %c0_i32_0 = arith.constant 0 : i32
    %c0_i32_1 = arith.constant 0 : i32
    return %c0_i32, %c0_i32_0 : i32, i32
  }
  func.func @transform_3(%arg0: i32) -> (i32, i32) {
    %c0_i32 = arith.constant 0 : i32
    %c0_i32_0 = arith.constant 0 : i32
    %c0_i32_1 = arith.constant 0 : i32
    return %c0_i32, %c0_i32_0 : i32, i32
  }
  func.func @transform_4(%arg0: i32) -> (i32, i32) {
    %c0_i32 = arith.constant 0 : i32
    %c0_i32_0 = arith.constant 0 : i32
    %c0_i32_1 = arith.constant 0 : i32
    return %c0_i32, %c0_i32_0 : i32, i32
  }
  func.func @transform_5(%arg0: i32) -> (i32, i32) {
    %c0_i32 = arith.constant 0 : i32
    %c0_i32_0 = arith.constant 0 : i32
    %c0_i32_1 = arith.constant 0 : i32
    return %c0_i32, %c0_i32_0 : i32, i32
  }
  func.func @transform_6(%arg0: i32) -> (i32, i32) {
    %c0_i32 = arith.constant 0 : i32
    %c0_i32_0 = arith.constant 0 : i32
    %c0_i32_1 = arith.constant 0 : i32
    return %c0_i32, %c0_i32_0 : i32, i32
  }
  func.func @transform_7(%arg0: i32) -> (i32, i32) {
    %c0_i32 = arith.constant 0 : i32
    %c0_i32_0 = arith.constant 0 : i32
    %c0_i32_1 = arith.constant 0 : i32
    return %c0_i32, %c0_i32_0 : i32, i32
  }
  func.func @transform_8(%arg0: i32) -> (i32, i32) {
    %c0_i32 = arith.constant 0 : i32
    %c0_i32_0 = arith.constant 0 : i32
    return %arg0, %c0_i32 : i32, i32
  }
  func.func @transform_9(%arg0: i32) -> (i32, i32) {
    %c0_i32 = arith.constant 0 : i32
    %c0_i32_0 = arith.constant 0 : i32
    return %arg0, %c0_i32 : i32, i32
  }
}

</mosaic_0001>

<llo_original>
// kernel: tpu_custom_call.1
$region0: #{tpu_custom_call.1}
  #allocation0 [shape = 'u32[]', space=smem, size = 0x4, offset = 0x4, fixed_abs, tag = 'smem constant byte address 0x4 - core index']
  #allocation1 [shape = 'u32[72,128]{1,0:T(1,128)}', space=vmem, size = 0x9000, scoped, tag = 'internal scratch']
  %s0 = inlined_call_operand.hbm [shape: f32[8,64], index: 0, kind: input, shape index: {}]
  %s1 = inlined_call_operand.hbm [shape: f32[64,128], index: 1, kind: input, shape index: {}]
  %s2 = inlined_call_operand.hbm [shape: f32[128,128], index: 2, kind: input, shape index: {}]
  %s3 = inlined_call_operand.hbm [shape: f32[128,128], index: 3, kind: input, shape index: {}]
  %s4 = inlined_call_operand.hbm [shape: f32[128,128], index: 4, kind: input, shape index: {}]
  %s5 = inlined_call_operand.hbm [shape: f32[128,128], index: 5, kind: input, shape index: {}]
  %s6 = inlined_call_operand.hbm [shape: f32[128,128], index: 6, kind: input, shape index: {}]
  %s7 = inlined_call_operand.hbm [shape: f32[8,128], index: 7, kind: input, shape index: {}]
  %s8 = inlined_call_operand.hbm [shape: f32[8,128], index: 8, kind: output, shape index: {0}]
  %s9 = inlined_call_operand.hbm [shape: f32[8,128], index: 9, kind: output, shape index: {1}]
  %10 = xla_tuple %s8, %s9
  %s11 = sld [smem:[#allocation0]]
  $region82: #{tpu_custom_call.1} parent=0
    _
  %s13 = ssub.s32 1, %s11
  %s14 = scalar_select 0, %s13, %s11
  $region1: #{tpu_custom_call.1} parent=0
    #allocation2 [shape = 'u8[4096]{0}', space=vmem, size = 0x1000, scoped, tag = 'input window, operand 0, single buffered']
    #allocation3 [shape = 's32[1]{0}', space=sflag, size = 0x4, scoped, tag = 'scoped memory for tpu_custom_call.1']
    #allocation4 [shape = 's32[1]{0}', space=sflag, size = 0x4, scoped, tag = 'scoped memory for tpu_custom_call.1']
    #allocation5 [shape = 'u8[32768]{0}', space=vmem, size = 0x8000, scoped, tag = 'input window, operand 1, single buffered']
    #allocation6 [shape = 's32[1]{0}', space=sflag, size = 0x4, scoped, tag = 'scoped memory for tpu_custom_call.1']
    #allocation7 [shape = 'u8[65536]{0}', space=vmem, size = 0x10000, scoped, tag = 'input window, operand 2, single buffered']
    #allocation8 [shape = 'u8[65536]{0}', space=vmem, size = 0x10000, scoped, tag = 'input window, operand 3, single buffered']
    #allocation9 [shape = 's32[1]{0}', space=sflag, size = 0x4, scoped, tag = 'scoped memory for tpu_custom_call.1']
    #allocation10 [shape = 'u8[65536]{0}', space=vmem, size = 0x10000, scoped, tag = 'input window, operand 4, single buffered']
    #allocation11 [shape = 'u8[65536]{0}', space=vmem, size = 0x10000, scoped, tag = 'input window, operand 5, single buffered']
    #allocation12 [shape = 's32[1]{0}', space=sflag, size = 0x4, scoped, tag = 'scoped memory for tpu_custom_call.1']
    #allocation13 [shape = 'u8[65536]{0}', space=vmem, size = 0x10000, scoped, tag = 'input window, operand 6, single buffered']
    #allocation14 [shape = 'u8[4096]{0}', space=vmem, size = 0x1000, scoped, tag = 'input window, operand 7, single buffered']
    #allocation15 [shape = 's32[1]{0}', space=sflag, size = 0x4, scoped, tag = 'scoped memory for tpu_custom_call.1']
    #allocation16 [shape = 'u8[4096]{0}', space=vmem, size = 0x1000, scoped, tag = 'output window, operand 0, single buffered']
    #allocation17 [shape = 'u8[4096]{0}', space=vmem, size = 0x1000, scoped, tag = 'output window, operand 1, single buffered']
    #allocation18 [shape = 's32[1]{0}', space=sflag, size = 0x4, scoped, tag = 'scoped memory for tpu_custom_call.1']
    %15 = vsyncpa [#allocation3], 0
    %16 = vsyncpa [#allocation6], 0
    %17 = vsyncpa [#allocation9], 0
    %18 = vsyncpa [#allocation12], 0
    %19 = vsyncpa [#allocation15], 0
    %20 = vsyncpa [#allocation4], 0
    %21 = vsyncpa [#allocation18], 0
    // Predicated region
    $region2: #{tpu_custom_call.1} parent=1 // pred_check
      _
    $region3: #{tpu_custom_call.1} parent=1 // pred_check_branch
      %23 = sbr.rel (0) target = $region5
    $region4: #{tpu_custom_call.1} parent=1 // pred_region
      %25 = vsyncadd [#allocation3], 0
      %s27 = sshll.u32 %s0, 4
      %s28 = int_to_ptr.hbm [resolvable:$true] %s27
      %s29 = sshll.u32 [#allocation2], 4
      %s30 = int_to_ptr.vmem [resolvable:$true] %s29
      %32 = dma.hbm_to_vmem [thread:$0]  %s28, 128, %s30, [#allocation3]
    $region5: #{tpu_custom_call.1} parent=1 // pred_fallthru
      _
    // Predicated region
    $region6: #{tpu_custom_call.1} parent=1 // pred_check
      _
    $region7: #{tpu_custom_call.1} parent=1 // pred_check_branch
      %34 = sbr.rel (0) target = $region9
    $region8: #{tpu_custom_call.1} parent=1 // pred_region
      %36 = vsyncadd [#allocation6], 0
      %s37 = sshll.u32 %s1, 4
      %s38 = int_to_ptr.hbm [resolvable:$true] %s37
      %s39 = sshll.u32 [#allocation5], 4
      %s40 = int_to_ptr.vmem [resolvable:$true] %s39
      %45 = dma.hbm_to_vmem [thread:$0]  %s38, 1024, %s40, [#allocation6], 128, 128, 8
    $region9: #{tpu_custom_call.1} parent=1 // pred_fallthru
      _
    // Predicated region
    $region10: #{tpu_custom_call.1} parent=1 // pred_check
      _
    $region11: #{tpu_custom_call.1} parent=1 // pred_check_branch
      %47 = sbr.rel (0) target = $region13
    $region12: #{tpu_custom_call.1} parent=1 // pred_region
      %49 = vsyncadd [#allocation6], 0
      %s50 = sshll.u32 %s2, 4
      %s51 = int_to_ptr.hbm [resolvable:$true] %s50
      %s52 = sshll.u32 [#allocation7], 4
      %s53 = int_to_ptr.vmem [resolvable:$true] %s52
      %58 = dma.hbm_to_vmem [thread:$0]  %s51, 2048, %s53, [#allocation6], 128, 128, 8
    $region13: #{tpu_custom_call.1} parent=1 // pred_fallthru
      _
    // Predicated region
    $region14: #{tpu_custom_call.1} parent=1 // pred_check
      _
    $region15: #{tpu_custom_call.1} parent=1 // pred_check_branch
      %60 = sbr.rel (0) target = $region17
    $region16: #{tpu_custom_call.1} parent=1 // pred_region
      %62 = vsyncadd [#allocation9], 0
      %s63 = sshll.u32 %s3, 4
      %s64 = int_to_ptr.hbm [resolvable:$true] %s63
      %s65 = sshll.u32 [#allocation8], 4
      %s66 = int_to_ptr.vmem [resolvable:$true] %s65
      %71 = dma.hbm_to_vmem [thread:$0]  %s64, 2048, %s66, [#allocation9], 128, 128, 8
    $region17: #{tpu_custom_call.1} parent=1 // pred_fallthru
      _
    // Predicated region
    $region18: #{tpu_custom_call.1} parent=1 // pred_check
      _
    $region19: #{tpu_custom_call.1} parent=1 // pred_check_branch
      %73 = sbr.rel (0) target = $region21
    $region20: #{tpu_custom_call.1} parent=1 // pred_region
      %75 = vsyncadd [#allocation9], 0
      %s76 = sshll.u32 %s4, 4
      %s77 = int_to_ptr.hbm [resolvable:$true] %s76
      %s78 = sshll.u32 [#allocation10], 4
      %s79 = int_to_ptr.vmem [resolvable:$true] %s78
      %84 = dma.hbm_to_vmem [thread:$0]  %s77, 2048, %s79, [#allocation9], 128, 128, 8
    $region21: #{tpu_custom_call.1} parent=1 // pred_fallthru
      _
    // Predicated region
    $region22: #{tpu_custom_call.1} parent=1 // pred_check
      _
    $region23: #{tpu_custom_call.1} parent=1 // pred_check_branch
      %86 = sbr.rel (0) target = $region25
    $region24: #{tpu_custom_call.1} parent=1 // pred_region
      %88 = vsyncadd [#allocation12], 0
      %s89 = sshll.u32 %s5, 4
      %s90 = int_to_ptr.hbm [resolvable:$true] %s89
      %s91 = sshll.u32 [#allocation11], 4
      %s92 = int_to_ptr.vmem [resolvable:$true] %s91
      %97 = dma.hbm_to_vmem [thread:$0]  %s90, 2048, %s92, [#allocation12], 128, 128, 8
    $region25: #{tpu_custom_call.1} parent=1 // pred_fallthru
      _
    // Predicated region
    $region26: #{tpu_custom_call.1} parent=1 // pred_check
      _
    $region27: #{tpu_custom_call.1} parent=1 // pred_check_branch
      %99 = sbr.rel (0) target = $region29
    $region28: #{tpu_custom_call.1} parent=1 // pred_region
      %101 = vsyncadd [#allocation12], 0
      %s102 = sshll.u32 %s6, 4
      %s103 = int_to_ptr.hbm [resolvable:$true] %s102
      %s104 = sshll.u32 [#allocation13], 4
      %s105 = int_to_ptr.vmem [resolvable:$true] %s104
      %110 = dma.hbm_to_vmem [thread:$0]  %s103, 2048, %s105, [#allocation12], 128, 128, 8
    $region29: #{tpu_custom_call.1} parent=1 // pred_fallthru
      _
    // Predicated region
    $region30: #{tpu_custom_call.1} parent=1 // pred_check
      _
    $region31: #{tpu_custom_call.1} parent=1 // pred_check_branch
      %112 = sbr.rel (0) target = $region33
    $region32: #{tpu_custom_call.1} parent=1 // pred_region
      %114 = vsyncadd [#allocation15], 0
      %s116 = sshll.u32 %s7, 4
      %s117 = int_to_ptr.hbm [resolvable:$true] %s116
      %s118 = sshll.u32 [#allocation14], 4
      %s119 = int_to_ptr.vmem [resolvable:$true] %s118
      %121 = dma.hbm_to_vmem [thread:$0]  %s117, 128, %s119, [#allocation15]
    $region33: #{tpu_custom_call.1} parent=1 // pred_fallthru
      _
    // Predicated region
    $region34: #{tpu_custom_call.1} parent=1 // pred_check
      _
    $region35: #{tpu_custom_call.1} parent=1 // pred_check_branch
      %123 = sbr.rel (0) target = $region37
    $region36: #{tpu_custom_call.1} parent=1 // pred_region
      %125 = dma.done [#allocation3], 128
    $region37: #{tpu_custom_call.1} parent=1 // pred_fallthru
      _
    // Predicated region
    $region38: #{tpu_custom_call.1} parent=1 // pred_check
      _
    $region39: #{tpu_custom_call.1} parent=1 // pred_check_branch
      %127 = sbr.rel (0) target = $region41
    $region40: #{tpu_custom_call.1} parent=1 // pred_region
      %129 = dma.done [#allocation6], 1024
    $region41: #{tpu_custom_call.1} parent=1 // pred_fallthru
      _
    // Predicated region
    $region42: #{tpu_custom_call.1} parent=1 // pred_check
      _
    $region43: #{tpu_custom_call.1} parent=1 // pred_check_branch
      %131 = sbr.rel (0) target = $region45
    $region44: #{tpu_custom_call.1} parent=1 // pred_region
      %133 = dma.done [#allocation6], 2048
    $region45: #{tpu_custom_call.1} parent=1 // pred_fallthru
      _
    // Predicated region
    $region46: #{tpu_custom_call.1} parent=1 // pred_check
      _
    $region47: #{tpu_custom_call.1} parent=1 // pred_check_branch
      %135 = sbr.rel (0) target = $region49
    $region48: #{tpu_custom_call.1} parent=1 // pred_region
      %137 = dma.done [#allocation9], 2048
    $region49: #{tpu_custom_call.1} parent=1 // pred_fallthru
      _
    // Predicated region
    $region50: #{tpu_custom_call.1} parent=1 // pred_check
      _
    $region51: #{tpu_custom_call.1} parent=1 // pred_check_branch
      %139 = sbr.rel (0) target = $region53
    $region52: #{tpu_custom_call.1} parent=1 // pred_region
      %141 = dma.done [#allocation9], 2048
    $region53: #{tpu_custom_call.1} parent=1 // pred_fallthru
      _
    // Predicated region
    $region54: #{tpu_custom_call.1} parent=1 // pred_check
      _
    $region55: #{tpu_custom_call.1} parent=1 // pred_check_branch
      %143 = sbr.rel (0) target = $region57
    $region56: #{tpu_custom_call.1} parent=1 // pred_region
      %145 = dma.done [#allocation12], 2048
    $region57: #{tpu_custom_call.1} parent=1 // pred_fallthru
      _
    // Predicated region
    $region58: #{tpu_custom_call.1} parent=1 // pred_check
      _
    $region59: #{tpu_custom_call.1} parent=1 // pred_check_branch
      %147 = sbr.rel (0) target = $region61
    $region60: #{tpu_custom_call.1} parent=1 // pred_region
      %149 = dma.done [#allocation12], 2048
    $region61: #{tpu_custom_call.1} parent=1 // pred_fallthru
      _
    // Predicated region
    $region62: #{tpu_custom_call.1} parent=1 // pred_check
      _
    $region63: #{tpu_custom_call.1} parent=1 // pred_check_branch
      %151 = sbr.rel (0) target = $region65
    $region64: #{tpu_custom_call.1} parent=1 // pred_region
      %153 = dma.done [#allocation15], 128
    $region65: #{tpu_custom_call.1} parent=1 // pred_fallthru
      _
    %v154 = vld [vmem:[#allocation2] sm:$0xff]
    %v155 = vld [vmem:[#allocation5] sm:$0xff]
    %v156 = vld [vmem:[#allocation5 + $0x8] sm:$0xff]
    %v157 = vld [vmem:[#allocation5 + $0x10] sm:$0xff]
    %v158 = vld [vmem:[#allocation5 + $0x18] sm:$0xff]
    %v159 = vld [vmem:[#allocation5 + $0x20] sm:$0xff]
    %v160 = vld [vmem:[#allocation5 + $0x28] sm:$0xff]
    %v161 = vld [vmem:[#allocation5 + $0x30] sm:$0xff]
    %v162 = vld [vmem:[#allocation5 + $0x38] sm:$0xff]
    %v163 = vld [vmem:[#allocation14] sm:$0x1]
    %v164 = vperm.slane %v163, 0
    %vm165 = vcmask 523264
    %v167 = vsel %vm165, %v154, 0
    %169 = vmatpush.msra.mxu0 0.0
    %170 = vmatpush.msra.mxu0 0.0
    %171 = vmatpush.msra.mxu0 0.0
    %172 = vmatpush.msra.mxu0 0.0
    %173 = vmatpush.msra.mxu0 0.0
    %174 = vmatpush.msra.mxu0 0.0
    %175 = vmatpush.msra.mxu0 0.0
    %176 = vmatpush.msra.mxu0 0.0
    %177 = vmatpush.msra.mxu0 %v162
    %178 = vmatpush.msra.mxu0 %v161
    %179 = vmatpush.msra.mxu0 %v160
    %180 = vmatpush.msra.mxu0 %v159
    %181 = vmatpush.msra.mxu0 %v158
    %182 = vmatpush.msra.mxu0 %v157
    %183 = vmatpush.msra.mxu0 %v156
    %184 = vmatpush.msra.mxu0 %v155
    %185 = vmatmul.f32.gmra.mxu0 %v167
    %v186 = vpop.f32.mrf.mxu0
    %v187 = vadd.f32 %v164, %v186
    %188 = vdwg.mxu0
    %v189 = vmax.f32 %v187, 0.0
    %v190 = vld [vmem:[#allocation7] sm:$0xff]
    %v191 = vld [vmem:[#allocation7 + $0x8] sm:$0xff]
    %v192 = vld [vmem:[#allocation7 + $0x10] sm:$0xff]
    %v193 = vld [vmem:[#allocation7 + $0x18] sm:$0xff]
    %v194 = vld [vmem:[#allocation7 + $0x20] sm:$0xff]
    %v195 = vld [vmem:[#allocation7 + $0x28] sm:$0xff]
    %v196 = vld [vmem:[#allocation7 + $0x30] sm:$0xff]
    %v197 = vld [vmem:[#allocation7 + $0x38] sm:$0xff]
    %v198 = vld [vmem:[#allocation7 + $0x40] sm:$0xff]
    %v199 = vld [vmem:[#allocation7 + $0x48] sm:$0xff]
    %v200 = vld [vmem:[#allocation7 + $0x50] sm:$0xff]
    %v201 = vld [vmem:[#allocation7 + $0x58] sm:$0xff]
    %v202 = vld [vmem:[#allocation7 + $0x60] sm:$0xff]
    %v203 = vld [vmem:[#allocation7 + $0x68] sm:$0xff]
    %v204 = vld [vmem:[#allocation7 + $0x70] sm:$0xff]
    %v205 = vld [vmem:[#allocation7 + $0x78] sm:$0xff]
    %v206 = vld [vmem:[#allocation14 + $0x1] sm:$0x1]
    %v207 = vperm.slane %v206, 0
    %208 = vmatpush.msra.mxu0 %v205
    %209 = vmatpush.msra.mxu0 %v204
    %210 = vmatpush.msra.mxu0 %v203
    %211 = vmatpush.msra.mxu0 %v202
    %212 = vmatpush.msra.mxu0 %v201
    %213 = vmatpush.msra.mxu0 %v200
    %214 = vmatpush.msra.mxu0 %v199
    %215 = vmatpush.msra.mxu0 %v198
    %216 = vmatpush.msra.mxu0 %v197
    %217 = vmatpush.msra.mxu0 %v196
    %218 = vmatpush.msra.mxu0 %v195
    %219 = vmatpush.msra.mxu0 %v194
    %220 = vmatpush.msra.mxu0 %v193
    %221 = vmatpush.msra.mxu0 %v192
    %222 = vmatpush.msra.mxu0 %v191
    %223 = vmatpush.msra.mxu0 %v190
    %224 = vmatmul.f32.gmra.mxu0 %v189
    %v225 = vpop.f32.mrf.mxu0
    %v226 = vadd.f32 %v207, %v225
    %227 = vdwg.mxu0
    %v228 = vmax.f32 %v226, 0.0
    %v229 = vld [vmem:[#allocation8] sm:$0xff]
    %v230 = vld [vmem:[#allocation8 + $0x8] sm:$0xff]
    %v231 = vld [vmem:[#allocation8 + $0x10] sm:$0xff]
    %v232 = vld [vmem:[#allocation8 + $0x18] sm:$0xff]
    %v233 = vld [vmem:[#allocation8 + $0x20] sm:$0xff]
    %v234 = vld [vmem:[#allocation8 + $0x28] sm:$0xff]
    %v235 = vld [vmem:[#allocation8 + $0x30] sm:$0xff]
    %v236 = vld [vmem:[#allocation8 + $0x38] sm:$0xff]
    %v237 = vld [vmem:[#allocation8 + $0x40] sm:$0xff]
    %v238 = vld [vmem:[#allocation8 + $0x48] sm:$0xff]
    %v239 = vld [vmem:[#allocation8 + $0x50] sm:$0xff]
    %v240 = vld [vmem:[#allocation8 + $0x58] sm:$0xff]
    %v241 = vld [vmem:[#allocation8 + $0x60] sm:$0xff]
    %v242 = vld [vmem:[#allocation8 + $0x68] sm:$0xff]
    %v243 = vld [vmem:[#allocation8 + $0x70] sm:$0xff]
    %v244 = vld [vmem:[#allocation8 + $0x78] sm:$0xff]
    %v245 = vld [vmem:[#allocation14 + $0x2] sm:$0x1]
    %v246 = vperm.slane %v245, 0
    %247 = vmatpush.msra.mxu0 %v244
    %248 = vmatpush.msra.mxu0 %v243
    %249 = vmatpush.msra.mxu0 %v242
    %250 = vmatpush.msra.mxu0 %v241
    %251 = vmatpush.msra.mxu0 %v240
    %252 = vmatpush.msra.mxu0 %v239
    %253 = vmatpush.msra.mxu0 %v238
    %254 = vmatpush.msra.mxu0 %v237
    %255 = vmatpush.msra.mxu0 %v236
    %256 = vmatpush.msra.mxu0 %v235
    %257 = vmatpush.msra.mxu0 %v234
    %258 = vmatpush.msra.mxu0 %v233
    %259 = vmatpush.msra.mxu0 %v232
    %260 = vmatpush.msra.mxu0 %v231
    %261 = vmatpush.msra.mxu0 %v230
    %262 = vmatpush.msra.mxu0 %v229
    %263 = vmatmul.f32.gmra.mxu0 %v228
    %v264 = vpop.f32.mrf.mxu0
    %v265 = vadd.f32 %v246, %v264
    %266 = vdwg.mxu0
    %267 = vst [vmem:[#allocation16] sm:$0xff] %v265
    %v268 = vld [vmem:[#allocation10] sm:$0xff]
    %v269 = vld [vmem:[#allocation10 + $0x8] sm:$0xff]
    %v270 = vld [vmem:[#allocation10 + $0x10] sm:$0xff]
    %v271 = vld [vmem:[#allocation10 + $0x18] sm:$0xff]
    %v272 = vld [vmem:[#allocation10 + $0x20] sm:$0xff]
    %v273 = vld [vmem:[#allocation10 + $0x28] sm:$0xff]
    %v274 = vld [vmem:[#allocation10 + $0x30] sm:$0xff]
    %v275 = vld [vmem:[#allocation10 + $0x38] sm:$0xff]
    %v276 = vld [vmem:[#allocation10 + $0x40] sm:$0xff]
    %v277 = vld [vmem:[#allocation10 + $0x48] sm:$0xff]
    %v278 = vld [vmem:[#allocation10 + $0x50] sm:$0xff]
    %v279 = vld [vmem:[#allocation10 + $0x58] sm:$0xff]
    %v280 = vld [vmem:[#allocation10 + $0x60] sm:$0xff]
    %v281 = vld [vmem:[#allocation10 + $0x68] sm:$0xff]
    %v282 = vld [vmem:[#allocation10 + $0x70] sm:$0xff]
    %v283 = vld [vmem:[#allocation10 + $0x78] sm:$0xff]
    %v284 = vld [vmem:[#allocation14 + $0x3] sm:$0x1]
    %v285 = vperm.slane %v284, 0
    %286 = vmatpush.msra.mxu0 %v283
    %287 = vmatpush.msra.mxu0 %v282
    %288 = vmatpush.msra.mxu0 %v281
    %289 = vmatpush.msra.mxu0 %v280
    %290 = vmatpush.msra.mxu0 %v279
    %291 = vmatpush.msra.mxu0 %v278
    %292 = vmatpush.msra.mxu0 %v277
    %293 = vmatpush.msra.mxu0 %v276
    %294 = vmatpush.msra.mxu0 %v275
    %295 = vmatpush.msra.mxu0 %v274
    %296 = vmatpush.msra.mxu0 %v273
    %297 = vmatpush.msra.mxu0 %v272
    %298 = vmatpush.msra.mxu0 %v271
    %299 = vmatpush.msra.mxu0 %v270
    %300 = vmatpush.msra.mxu0 %v269
    %301 = vmatpush.msra.mxu0 %v268
    %302 = vmatmul.f32.gmra.mxu0 %v265
    %v303 = vpop.f32.mrf.mxu0
    %v304 = vadd.f32 %v285, %v303
    %305 = vdwg.mxu0
    %v306 = vmax.f32 %v304, 0.0
    %v307 = vld [vmem:[#allocation11] sm:$0xff]
    %v308 = vld [vmem:[#allocation11 + $0x8] sm:$0xff]
    %v309 = vld [vmem:[#allocation11 + $0x10] sm:$0xff]
    %v310 = vld [vmem:[#allocation11 + $0x18] sm:$0xff]
    %v311 = vld [vmem:[#allocation11 + $0x20] sm:$0xff]
    %v312 = vld [vmem:[#allocation11 + $0x28] sm:$0xff]
    %v313 = vld [vmem:[#allocation11 + $0x30] sm:$0xff]
    %v314 = vld [vmem:[#allocation11 + $0x38] sm:$0xff]
    %v315 = vld [vmem:[#allocation11 + $0x40] sm:$0xff]
    %v316 = vld [vmem:[#allocation11 + $0x48] sm:$0xff]
    %v317 = vld [vmem:[#allocation11 + $0x50] sm:$0xff]
    %v318 = vld [vmem:[#allocation11 + $0x58] sm:$0xff]
    %v319 = vld [vmem:[#allocation11 + $0x60] sm:$0xff]
    %v320 = vld [vmem:[#allocation11 + $0x68] sm:$0xff]
    %v321 = vld [vmem:[#allocation11 + $0x70] sm:$0xff]
    %v322 = vld [vmem:[#allocation11 + $0x78] sm:$0xff]
    %v323 = vld [vmem:[#allocation14 + $0x4] sm:$0x1]
    %v324 = vperm.slane %v323, 0
    %325 = vmatpush.msra.mxu0 %v322
    %326 = vmatpush.msra.mxu0 %v321
    %327 = vmatpush.msra.mxu0 %v320
    %328 = vmatpush.msra.mxu0 %v319
    %329 = vmatpush.msra.mxu0 %v318
    %330 = vmatpush.msra.mxu0 %v317
    %331 = vmatpush.msra.mxu0 %v316
    %332 = vmatpush.msra.mxu0 %v315
    %333 = vmatpush.msra.mxu0 %v314
    %334 = vmatpush.msra.mxu0 %v313
    %335 = vmatpush.msra.mxu0 %v312
    %336 = vmatpush.msra.mxu0 %v311
    %337 = vmatpush.msra.mxu0 %v310
    %338 = vmatpush.msra.mxu0 %v309
    %339 = vmatpush.msra.mxu0 %v308
    %340 = vmatpush.msra.mxu0 %v307
    %341 = vmatmul.f32.gmra.mxu0 %v306
    %v342 = vpop.f32.mrf.mxu0
    %v343 = vadd.f32 %v324, %v342
    %344 = vdwg.mxu0
    %v345 = vmax.f32 %v343, 0.0
    %v346 = vld [vmem:[#allocation13] sm:$0xff]
    %v347 = vld [vmem:[#allocation13 + $0x8] sm:$0xff]
    %v348 = vld [vmem:[#allocation13 + $0x10] sm:$0xff]
    %v349 = vld [vmem:[#allocation13 + $0x18] sm:$0xff]
    %v350 = vld [vmem:[#allocation13 + $0x20] sm:$0xff]
    %v351 = vld [vmem:[#allocation13 + $0x28] sm:$0xff]
    %v352 = vld [vmem:[#allocation13 + $0x30] sm:$0xff]
    %v353 = vld [vmem:[#allocation13 + $0x38] sm:$0xff]
    %v354 = vld [vmem:[#allocation13 + $0x40] sm:$0xff]
    %v355 = vld [vmem:[#allocation13 + $0x48] sm:$0xff]
    %v356 = vld [vmem:[#allocation13 + $0x50] sm:$0xff]
    %v357 = vld [vmem:[#allocation13 + $0x58] sm:$0xff]
    %v358 = vld [vmem:[#allocation13 + $0x60] sm:$0xff]
    %v359 = vld [vmem:[#allocation13 + $0x68] sm:$0xff]
    %v360 = vld [vmem:[#allocation13 + $0x70] sm:$0xff]
    %v361 = vld [vmem:[#allocation13 + $0x78] sm:$0xff]
    %v362 = vld [vmem:[#allocation14 + $0x5] sm:$0x1]
    %v363 = vperm.slane %v362, 0
    %364 = vmatpush.msra.mxu0 %v361
    %365 = vmatpush.msra.mxu0 %v360
    %366 = vmatpush.msra.mxu0 %v359
    %367 = vmatpush.msra.mxu0 %v358
    %368 = vmatpush.msra.mxu0 %v357
    %369 = vmatpush.msra.mxu0 %v356
    %370 = vmatpush.msra.mxu0 %v355
    %371 = vmatpush.msra.mxu0 %v354
    %372 = vmatpush.msra.mxu0 %v353
    %373 = vmatpush.msra.mxu0 %v352
    %374 = vmatpush.msra.mxu0 %v351
    %375 = vmatpush.msra.mxu0 %v350
    %376 = vmatpush.msra.mxu0 %v349
    %377 = vmatpush.msra.mxu0 %v348
    %378 = vmatpush.msra.mxu0 %v347
    %379 = vmatpush.msra.mxu0 %v346
    %380 = vmatmul.f32.gmra.mxu0 %v345
    %v381 = vpop.f32.mrf.mxu0
    %v382 = vadd.f32 %v363, %v381
    %383 = vdwg.mxu0
    %384 = vst [vmem:[#allocation17] sm:$0xff] %v382
    // Predicated region
    $region66: #{tpu_custom_call.1} parent=1 // pred_check
      _
    $region67: #{tpu_custom_call.1} parent=1 // pred_check_branch
      %386 = sbr.rel (0) target = $region69
    $region68: #{tpu_custom_call.1} parent=1 // pred_region
      %388 = vsyncadd [#allocation4], 0
      %s390 = sshll.u32 [#allocation16], 4
      %s391 = int_to_ptr.vmem [resolvable:$true] %s390
      %s392 = sshll.u32 %s8, 4
      %s393 = int_to_ptr.hbm [resolvable:$true] %s392
      %395 = dma.vmem_to_hbm [thread:$0]  %s391, 128, %s393, [#allocation4]
    $region69: #{tpu_custom_call.1} parent=1 // pred_fallthru
      _
    // Predicated region
    $region70: #{tpu_custom_call.1} parent=1 // pred_check
      _
    $region71: #{tpu_custom_call.1} parent=1 // pred_check_branch
      %397 = sbr.rel (0) target = $region73
    $region72: #{tpu_custom_call.1} parent=1 // pred_region
      %399 = vsyncadd [#allocation18], 0
      %s401 = sshll.u32 [#allocation17], 4
      %s402 = int_to_ptr.vmem [resolvable:$true] %s401
      %s403 = sshll.u32 %s9, 4
      %s404 = int_to_ptr.hbm [resolvable:$true] %s403
      %406 = dma.vmem_to_hbm [thread:$0]  %s402, 128, %s404, [#allocation18]
    $region73: #{tpu_custom_call.1} parent=1 // pred_fallthru
      _
    // Predicated region
    $region74: #{tpu_custom_call.1} parent=1 // pred_check
      _
    $region75: #{tpu_custom_call.1} parent=1 // pred_check_branch
      %408 = sbr.rel (0) target = $region77
    $region76: #{tpu_custom_call.1} parent=1 // pred_region
      %410 = dma.done [#allocation4], 128
    $region77: #{tpu_custom_call.1} parent=1 // pred_fallthru
      _
    // Predicated region
    $region78: #{tpu_custom_call.1} parent=1 // pred_check
      _
    $region79: #{tpu_custom_call.1} parent=1 // pred_check_branch
      %412 = sbr.rel (0) target = $region81
    $region80: #{tpu_custom_call.1} parent=1 // pred_region
      %414 = dma.done [#allocation18], 128
    $region81: #{tpu_custom_call.1} parent=1 // pred_fallthru
      _
    %415 = vsyncpa [#allocation3], 1
    %416 = vsyncpa [#allocation6], 1
    %417 = vsyncpa [#allocation9], 1
    %418 = vsyncpa [#allocation12], 1
    %419 = vsyncpa [#allocation15], 1
    %420 = vsyncpa [#allocation4], 1
    %421 = vsyncpa [#allocation18], 1

</llo_original>
